<compile_context>
chip_gen: v6e
topology: v6e:2x2x1
jax: 0.10.0
libtpu: 0.0.40
codegen_flags: <defaults>
</compile_context>

<pallas_src>
import math

import jax
import jax.numpy as jnp
from jax.experimental import pallas as pl
from jax.experimental.pallas import tpu as pltpu


_LANE = 128
_MIN_CHUNK_BYTES = 256 * 1024   # split the copy into >=256 KiB DMA chunks
_MAX_DMA_CHUNKS = 8             # issue at most this many concurrent DMAs


def _make_dma_copy_kernel(chunks):
    """Build a kernel that copies disjoint row-chunks HBM->HBM via async DMA.

    `chunks` is a static Python list of (row_start, row_size) pairs, so every
    ref slice below is a zero-cost static view and every DMA has a static
    descriptor.  All DMAs are started first, then waited on, so independent
    chunks can run on multiple DMA engines concurrently.
    """
    def kernel(x_hbm, o_hbm, sems):
        copies = []
        for idx, (start, size) in enumerate(chunks):
            cp = pltpu.make_async_copy(
                x_hbm.at[start:start + size, :],
                o_hbm.at[start:start + size, :],
                sems.at[idx],
            )
            cp.start()
            copies.append(cp)
        for cp in copies:
            cp.wait()
    return kernel


def flowernet_forward(x, *, force_pallas=False):
    """Pallas-backed forward for FlowerNetModule.

    The reference forward() is unimplemented (`pass`), so the semantics are an
    identity pass-through.  The default path simply returns `x` (the fastest
    possible identity: zero HBM traffic).  With force_pallas=True the tensor is
    streamed through a pure-DMA HBM->HBM Pallas copy as a scaffold for the
    future real FlowerNet compute.
    """
    if not force_pallas:
        # Identity with no observable side effects: never launch a kernel.
        return x

    orig_shape = x.shape
    total = math.prod(orig_shape) if orig_shape else 1
    itemsize = jnp.dtype(x.dtype).itemsize

    if total == 0 or total % _LANE != 0:
        # TODO(synk): handle ragged (non multiple-of-128) / empty sizes with a
        # masked tail once real FlowerNet compute lands; identity needs nothing.
        return x

    # Lane-dense 2-D slab: any multiple-of-128 column count is equivalent for a
    # contiguous DMA, so just use 128 columns (per review, no divisor search).
    cols = _LANE
    rows = total // cols
    x2d = x.reshape(rows, cols)

    # Chunk count: enough chunks to overlap DMA engines on big inputs, but each
    # chunk stays >= _MIN_CHUNK_BYTES so descriptor overhead is amortized.
    total_bytes = total * itemsize
    n_chunks = int(max(1, min(_MAX_DMA_CHUNKS, total_bytes // _MIN_CHUNK_BYTES, rows)))

    base, rem = divmod(rows, n_chunks)
    chunks = []
    start = 0
    for i in range(n_chunks):
        size = base + (1 if i < rem else 0)
        if size > 0:
            chunks.append((start, size))
        start += size

    kernel = _make_dma_copy_kernel(chunks)

    out2d = pl.pallas_call(
        kernel,
        out_shape=jax.ShapeDtypeStruct((rows, cols), x.dtype),
        # Both operands stay in HBM: no BlockSpec tiling, no VMEM round-trip.
        in_specs=[pl.BlockSpec(memory_space=pl.ANY)],
        out_specs=pl.BlockSpec(memory_space=pl.ANY),
        scratch_shapes=[pltpu.SemaphoreType.DMA((len(chunks),))],
        # Pure streaming copy: 0 flops, read + write of the whole tensor.
        cost_estimate=pl.CostEstimate(
            flops=0, transcendentals=0, bytes_accessed=2 * total_bytes),
        compiler_params=pltpu.CompilerParams(
            # The only work is DMA into the ANY-space output ref; keep the call
            # from being optimized away.
            has_side_effects=True,
        ),
    )(x2d)

    return out2d.reshape(orig_shape)


class FlowerNet:
    """JAX-side mirror of FlowerNetModule (stub model, no parameters)."""

    def __init__(self, force_pallas=False):
        # __init_model__ is `pass` in the reference -> no parameters.
        self.params = {}
        self.force_pallas = force_pallas

    def __call__(self, x):
        return flowernet_forward(x, force_pallas=self.force_pallas)


if __name__ == "__main__":
    key = jax.random.PRNGKey(0)
    k1, k2 = jax.random.split(key)

    # Small NCHW input consistent with a typical image-model forward signature.
    # force_pallas=True so the demo actually exercises the Pallas DMA path
    # (the default path is the unconditional identity bypass).
    x = jax.random.normal(k1, (2, 4, 16, 16), dtype=jnp.float32)
    model = FlowerNet(force_pallas=True)
    y = jax.block_until_ready(model(x))
    assert y.shape == x.shape and y.dtype == x.dtype
    assert bool(jnp.allclose(y, x))

    # Larger input so the copy is split into several concurrent DMA chunks.
    x2 = jax.random.normal(k2, (2, 36, 64, 64), dtype=jnp.float32)
    y2 = jax.block_until_ready(flowernet_forward(x2, force_pallas=True))
    assert y2.shape == x2.shape and y2.dtype == x2.dtype
    assert bool(jnp.allclose(y2, x2))

    # Default (non-forced) path: identity bypass, no kernel launch.
    y3 = jax.block_until_ready(flowernet_forward(x))
    assert bool(jnp.allclose(y3, x))

    print("KERNEL_OK")
</pallas_src>

<mosaic_0001>
module attributes {stable_mosaic.version = 11 : i64} {
  func.func @kernel(%arg0: memref<16x128xf32, #tpu.memory_space<any>>, %arg1: memref<16x128xf32, #tpu.memory_space<any>>, %arg2: memref<1x!tpu.dma_semaphore, #tpu.memory_space<semaphore_mem>>) attributes {dimension_semantics = [], scalar_prefetch = 0 : i64, scratch_operands = 1 : i64, tpu.core_type = #tpu.core_type<tc>} {
    %c0_i32 = arith.constant 0 : i32
    %c0_i32_0 = arith.constant 0 : i32
    %c0_i32_1 = arith.constant 0 : i32
    %0 = tpu.memref_slice %arg0[%c0_i32_0, %c0_i32_1] : memref<16x128xf32, #tpu.memory_space<any>> -> memref<16x128xf32, #tpu.memory_space<any>>
    %c0_i32_2 = arith.constant 0 : i32
    %c0_i32_3 = arith.constant 0 : i32
    %1 = tpu.memref_slice %arg1[%c0_i32_2, %c0_i32_3] : memref<16x128xf32, #tpu.memory_space<any>> -> memref<16x128xf32, #tpu.memory_space<any>>
    %2 = tpu.memref_slice %arg2[%c0_i32] : memref<1x!tpu.dma_semaphore, #tpu.memory_space<semaphore_mem>> -> memref<1x!tpu.dma_semaphore, #tpu.memory_space<semaphore_mem>>
    %3 = tpu.memref_squeeze %2 : memref<1x!tpu.dma_semaphore, #tpu.memory_space<semaphore_mem>> -> memref<!tpu.dma_semaphore, #tpu.memory_space<semaphore_mem>>
    tpu.enqueue_dma source(%0 : memref<16x128xf32, #tpu.memory_space<any>>) target(%1 : memref<16x128xf32, #tpu.memory_space<any>>) target_semaphore(%3 : memref<!tpu.dma_semaphore, #tpu.memory_space<semaphore_mem>>)
    %c0_i32_4 = arith.constant 0 : i32
    %c0_i32_5 = arith.constant 0 : i32
    %c0_i32_6 = arith.constant 0 : i32
    %4 = tpu.memref_slice %arg0[%c0_i32_5, %c0_i32_6] : memref<16x128xf32, #tpu.memory_space<any>> -> memref<16x128xf32, #tpu.memory_space<any>>
    %c0_i32_7 = arith.constant 0 : i32
    %c0_i32_8 = arith.constant 0 : i32
    %5 = tpu.memref_slice %arg1[%c0_i32_7, %c0_i32_8] : memref<16x128xf32, #tpu.memory_space<any>> -> memref<16x128xf32, #tpu.memory_space<any>>
    %6 = tpu.memref_slice %arg2[%c0_i32_4] : memref<1x!tpu.dma_semaphore, #tpu.memory_space<semaphore_mem>> -> memref<1x!tpu.dma_semaphore, #tpu.memory_space<semaphore_mem>>
    %7 = tpu.memref_squeeze %6 : memref<1x!tpu.dma_semaphore, #tpu.memory_space<semaphore_mem>> -> memref<!tpu.dma_semaphore, #tpu.memory_space<semaphore_mem>>
    tpu.wait_dma2 semaphore(%7 : memref<!tpu.dma_semaphore, #tpu.memory_space<semaphore_mem>>) src(%4 : memref<16x128xf32, #tpu.memory_space<any>>) dst(%5 : memref<16x128xf32, #tpu.memory_space<any>>)
    return
  }
}

</mosaic_0001>

<llo_original>
// kernel: tpu_custom_call.1
$region0: #{tpu_custom_call.1}
  #allocation0 [shape = 'u32[]', space=smem, size = 0x4, offset = 0x4, fixed_abs, tag = 'smem constant byte address 0x4 - core index']
  #allocation1 [shape = 'u32[144,128]{1,0:T(1,128)}', space=vmem, size = 0x12000, scoped, tag = 'internal scratch']
  #allocation2 [shape = 's32[1]{0}', space=sflag, size = 0x4, scoped, tag = 'scratch operand']
  #allocation3 [shape = 's32[]', space=sflag, size = 0x4, offset = 0, fixed_abs, tag = 'sflag constant byte address 0x0 - dummy sync flag']
  #allocation4 [shape = 'u32[0]{0}', space=smem, size = 0, offset = 0, fixed_abs, tag = 'smem constant byte address 0x0 - null']
  %s0 = inlined_call_operand.hbm [shape: f32[16,128], index: 0, kind: input, shape index: {}]
  %s1 = inlined_call_operand.hbm [shape: f32[16,128], index: 1, kind: output, shape index: {}]
  %s2 = sld [smem:[#allocation0]]
  $region2: #{tpu_custom_call.1} parent=0
    _
  %s4 = ssub.s32 1, %s2
  %s5 = scalar_select 0, %s4, %s2
  %s7 = sshll.u32 1, 14
  %s8 = sxor.u32 4294967295, %s7
  %12 = dma.general %s0, 256, %s1, [#allocation2], 131072, [#allocation4], 0, 0
  %s13 = smul.u32 16, 1
  %s14 = sshll.u32 %s13, 4
  %15 = dma.done [#allocation2], %s14
  %16 = vsyncmov [#allocation2]
  %s17 = vpop.sfrf %16
  %p18 = scmp.eq.s32.totalorder %s17, 0
  %p19 = pneg %p18
  %21 = shalt.err (%p19)

</llo_original>
